<compile_context>
chip_gen: v6e
topology: v6e:2x2x1
jax: 0.10.0
libtpu: 0.0.40
codegen_flags: <defaults>
</compile_context>

<pallas_src>
import functools

import jax
import jax.numpy as jnp
from jax.experimental import pallas as pl
from jax.experimental.pallas import tpu as pltpu


# ----------------------------- kernels ------------------------------------ #

def _biasfree_ln_cf_kernel(x_ref, w_ref, o_ref):
    # x_ref: (bblk, C, tn) tile; w_ref: (C, 1); o_ref: (bblk, C, tn)
    x = x_ref[...].astype(jnp.float32)
    inv_c = 1.0 / x.shape[1]
    mu = jnp.sum(x, axis=1, keepdims=True) * inv_c        # sublane reduce (XLU)
    d = x - mu
    var = jnp.sum(d * d, axis=1, keepdims=True) * inv_c   # centered, two-pass
    inv = jax.lax.rsqrt(var + 1e-5)
    w = w_ref[...].astype(jnp.float32)[None, :, :]         # (1, C, 1)
    o_ref[...] = (x * inv * w).astype(o_ref.dtype)


def _withbias_ln_cf_kernel(x_ref, w_ref, b_ref, o_ref):
    x = x_ref[...].astype(jnp.float32)
    inv_c = 1.0 / x.shape[1]
    mu = jnp.sum(x, axis=1, keepdims=True) * inv_c
    d = x - mu
    var = jnp.sum(d * d, axis=1, keepdims=True) * inv_c
    inv = jax.lax.rsqrt(var + 1e-5)
    w = w_ref[...].astype(jnp.float32)[None, :, :]
    b = b_ref[...].astype(jnp.float32)[None, :, :]
    o_ref[...] = (d * inv * w + b).astype(o_ref.dtype)


# ----------------------------- wrapper ------------------------------------ #

_LANE = 128
_MAX_TILE_BYTES = 4 * 1024 * 1024      # target per-tile size (~1.5-4 MiB)


@functools.lru_cache(maxsize=1)
def _vmem_budgets():
    """Per-generation (tile_budget_bytes, vmem_limit_bytes)."""
    vmem = None
    try:
        info = pltpu.get_tpu_info()
        for name in ("vmem_capacity_bytes", "vmem_bytes", "vmem_capacity"):
            v = getattr(info, name, None)
            if isinstance(v, int) and v > 0:
                vmem = v
                break
    except Exception:
        vmem = None
    if vmem is None:
        # Conservative defaults that are safe on every generation.
        return 16 * 1024 * 1024, 32 * 1024 * 1024
    if vmem >= 96 * 1024 * 1024:
        # v5e / v6e: 128 MiB physical VMEM.
        return 48 * 1024 * 1024, 96 * 1024 * 1024
    # v7x: 64 MiB physical per TensorCore; leave headroom for Mosaic scratch
    # and the in-kernel f32 upcast working set.
    return 20 * 1024 * 1024, 40 * 1024 * 1024


def _largest_divisor_leq(n, cap):
    cap = max(1, min(n, cap))
    for d in range(cap, 0, -1):
        if n % d == 0:
            return d
    return 1


def restormer_layernorm_nchw(x, weight, bias=None):
    """RestormerLayerNorm forward on an NCHW tensor.

    Equivalent to PyTorch `to_4d(BiasFree_LayerNorm(to_3d(x)), h, w)` when
    `bias is None`, and to the WithBias variant when `bias` is given.

    x: (B, C, H, W); weight: (C,); bias: (C,) or None.
    Returns an array of the same shape and dtype as x.
    """
    B, C, H, W = x.shape
    assert weight.shape == (C,)
    HW = H * W
    itemsize = jnp.dtype(x.dtype).itemsize
    tile_budget, vmem_limit = _vmem_budgets()

    x3 = x.reshape(B, C, HW)
    bytes_per_col = C * itemsize

    # --- spatial tile (lanes): multiple of 128 or the full spatial extent ---
    if HW <= _LANE:
        tn = HW                                   # full (tiny) spatial extent
    else:
        # x tile + out tile, each double-buffered => ~4 live tile copies.
        tn_budget = max(_LANE, (tile_budget // (4 * bytes_per_col)) // _LANE * _LANE)
        tn_bytes = max(_LANE, (_MAX_TILE_BYTES // bytes_per_col) // _LANE * _LANE)
        tn = int(min(tn_budget, tn_bytes))
        if tn >= HW:
            if B == 1 and HW > 512:
                # Keep >= 2 spatial tiles so v7x's two TensorCores share work.
                tn = int(pl.cdiv(pl.cdiv(HW, _LANE), 2) * _LANE)
            else:
                tn = HW                           # whole extent in one tile
        # else: tn is a multiple of 128 and HW may not divide evenly; the
        # ragged last block is handled by Pallas (padded reads, masked writes).

    # --- batch tile: pack several images per step when HW fits in one tile ---
    bblk = 1
    if tn == HW and B > 1:
        tile_bytes = max(1, bytes_per_col * HW)
        bblk_cap = max(1, min(tile_budget // (4 * tile_bytes),
                              _MAX_TILE_BYTES // tile_bytes,
                              B // 2))            # keep >= 2 grid steps
        bblk = _largest_divisor_leq(B, bblk_cap)

    grid = (B // bblk, int(pl.cdiv(HW, tn)))

    w2 = weight.reshape(C, 1)
    in_specs = [
        pl.BlockSpec((bblk, C, tn), lambda b, j: (b, 0, j)),   # x tile
        pl.BlockSpec((C, 1), lambda b, j: (0, 0)),             # broadcast weight
    ]
    args = [x3, w2]
    if bias is None:
        kernel = _biasfree_ln_cf_kernel
    else:
        assert bias.shape == (C,)
        kernel = _withbias_ln_cf_kernel
        in_specs.append(pl.BlockSpec((C, 1), lambda b, j: (0, 0)))
        args.append(bias.reshape(C, 1))

    cost = pl.CostEstimate(
        flops=8 * B * C * HW,
        transcendentals=B * HW,
        bytes_accessed=2 * B * C * HW * itemsize,
    )

    out = pl.pallas_call(
        kernel,
        out_shape=jax.ShapeDtypeStruct((B, C, HW), x.dtype),
        grid_spec=pltpu.PrefetchScalarGridSpec(
            num_scalar_prefetch=0,
            grid=grid,
            in_specs=in_specs,
            out_specs=pl.BlockSpec((bblk, C, tn), lambda b, j: (b, 0, j)),
        ),
        compiler_params=pltpu.CompilerParams(
            dimension_semantics=("parallel", "parallel"),
            vmem_limit_bytes=vmem_limit,
        ),
        cost_estimate=cost,
    )(*args)

    return out.reshape(B, C, H, W)


# ----------------------------- references --------------------------------- #

def _ref_biasfree_nchw(x, weight):
    x32 = x.astype(jnp.float32)
    B, C = x.shape[0], x.shape[1]
    x3 = x32.reshape(B, C, -1)                                  # (B, C, HW)
    var = jnp.var(x3, axis=1, keepdims=True)                    # over channels
    out = x3 / jnp.sqrt(var + 1e-5) * weight.astype(jnp.float32)[None, :, None]
    return out.reshape(x.shape).astype(x.dtype)


def _ref_withbias_nchw(x, weight, bias):
    x32 = x.astype(jnp.float32)
    B, C = x.shape[0], x.shape[1]
    x3 = x32.reshape(B, C, -1)
    mu = jnp.mean(x3, axis=1, keepdims=True)
    var = jnp.var(x3, axis=1, keepdims=True)
    out = (x3 - mu) / jnp.sqrt(var + 1e-5)
    out = out * weight.astype(jnp.float32)[None, :, None] \
          + bias.astype(jnp.float32)[None, :, None]
    return out.reshape(x.shape).astype(x.dtype)


# ------------------------------- test -------------------------------------- #

if __name__ == "__main__":
    key = jax.random.PRNGKey(0)
    kx, k2, k3, k4 = jax.random.split(key, 4)

    # Small shapes consistent with an XRestormer stage (dim=48, 16x16 spatial).
    B, C, H, W = 2, 48, 16, 16
    x = jax.random.normal(kx, (B, C, H, W), dtype=jnp.float32)
    weight = jnp.ones((C,), jnp.float32) + 0.01 * jnp.arange(C, dtype=jnp.float32)
    bias = 0.02 * jnp.arange(C, dtype=jnp.float32) - 0.3

    # BiasFree (LayerNorm_type='BiasFree') and WithBias variants.
    out_bf = restormer_layernorm_nchw(x, weight)
    out_wb = restormer_layernorm_nchw(x, weight, bias)
    jax.block_until_ready((out_bf, out_wb))

    ref_bf = _ref_biasfree_nchw(x, weight)
    ref_wb = _ref_withbias_nchw(x, weight, bias)
    assert out_bf.shape == x.shape and out_bf.dtype == x.dtype
    assert jnp.max(jnp.abs(out_bf - ref_bf)) < 1e-4, "BiasFree mismatch"
    assert jnp.max(jnp.abs(out_wb - ref_wb)) < 1e-4, "WithBias mismatch"

    # Non-128-multiple spatial extent, single full-extent tile (HW = 132).
    x_odd = jax.random.normal(k2, (1, C, 12, 11), dtype=jnp.float32)
    o_odd = restormer_layernorm_nchw(x_odd, weight)
    jax.block_until_ready(o_odd)
    assert jnp.max(jnp.abs(o_odd - _ref_biasfree_nchw(x_odd, weight))) < 1e-4

    # Tiny-spatial path (HW < 128, full-extent lane block).
    x_tiny = jax.random.normal(k3, (2, C, 8, 8), dtype=jnp.float32)    # HW = 64
    o_tiny = restormer_layernorm_nchw(x_tiny, weight, bias)
    jax.block_until_ready(o_tiny)
    assert jnp.max(jnp.abs(o_tiny - _ref_withbias_nchw(x_tiny, weight, bias))) < 1e-4

    # B=1 with HW large enough to force >=2 spatial tiles (megacore split) and
    # a ragged last block handled in-kernel (HW = 900, tn = 512 -> masked edge).
    x_rag = jax.random.normal(k4, (1, C, 30, 30), dtype=jnp.float32)
    o_rag_bf = restormer_layernorm_nchw(x_rag, weight)
    o_rag_wb = restormer_layernorm_nchw(x_rag, weight, bias)
    jax.block_until_ready((o_rag_bf, o_rag_wb))
    assert jnp.max(jnp.abs(o_rag_bf - _ref_biasfree_nchw(x_rag, weight))) < 1e-4
    assert jnp.max(jnp.abs(o_rag_wb - _ref_withbias_nchw(x_rag, weight, bias))) < 1e-4

    # B=1, HW = 1024 -> split evenly into two 512-lane tiles.
    x_big = jax.random.normal(k4, (1, C, 32, 32), dtype=jnp.float32)
    o_big = restormer_layernorm_nchw(x_big, weight, bias)
    jax.block_until_ready(o_big)
    assert jnp.max(jnp.abs(o_big - _ref_withbias_nchw(x_big, weight, bias))) < 1e-4

    print("KERNEL_OK")
</pallas_src>

<mosaic_0001>
module attributes {stable_mosaic.version = 11 : i64} {
  func.func @_biasfree_ln_cf_kernel(%arg0: i32, %arg1: i32, %arg2: memref<1x48x256xf32, #tpu.memory_space<vmem>>, %arg3: memref<48x1xf32, #tpu.memory_space<vmem>>, %arg4: memref<1x48x256xf32, #tpu.memory_space<vmem>>) attributes {dimension_semantics = [#tpu.dimension_semantics<parallel>, #tpu.dimension_semantics<parallel>], iteration_bounds = array<i64: 2, 1>, scalar_prefetch = 0 : i64, scratch_operands = 0 : i64, tpu.core_type = #tpu.core_type<tc>, window_params = [{transform_indices = @transform_0, window_bounds = array<i64: 1, 48, 256>}, {pipeline_mode = #tpu.pipeline_mode<synchronous>, transform_indices = @transform_1, window_bounds = array<i64: 48, 1>}, {transform_indices = @transform_2, window_bounds = array<i64: 1, 48, 256>}]} {
    %c0 = arith.constant 0 : index
    %c0_0 = arith.constant 0 : index
    %c0_1 = arith.constant 0 : index
    %0 = vector.load %arg2[%c0, %c0_0, %c0_1] : memref<1x48x256xf32, #tpu.memory_space<vmem>>, vector<1x48x256xf32>
    %cst = arith.constant dense<0.000000e+00> : vector<1x256xf32>
    %1 = vector.multi_reduction <add>, %0, %cst [1] : vector<1x48x256xf32> to vector<1x256xf32>
    %2 = vector.shape_cast %1 : vector<1x256xf32> to vector<1x1x256xf32>
    %cst_2 = arith.constant 0.020833334 : f32
    %3 = vector.broadcast %cst_2 : f32 to vector<1x1x256xf32>
    %4 = arith.mulf %2, %3 : vector<1x1x256xf32>
    %5 = vector.broadcast %4 : vector<1x1x256xf32> to vector<1x48x256xf32>
    %6 = arith.subf %0, %5 : vector<1x48x256xf32>
    %7 = arith.mulf %6, %6 : vector<1x48x256xf32>
    %cst_3 = arith.constant dense<0.000000e+00> : vector<1x256xf32>
    %8 = vector.multi_reduction <add>, %7, %cst_3 [1] : vector<1x48x256xf32> to vector<1x256xf32>
    %9 = vector.shape_cast %8 : vector<1x256xf32> to vector<1x1x256xf32>
    %cst_4 = arith.constant 0.020833334 : f32
    %10 = vector.broadcast %cst_4 : f32 to vector<1x1x256xf32>
    %11 = arith.mulf %9, %10 : vector<1x1x256xf32>
    %cst_5 = arith.constant 9.99999974E-6 : f32
    %12 = vector.broadcast %cst_5 : f32 to vector<1x1x256xf32>
    %13 = arith.addf %11, %12 : vector<1x1x256xf32>
    %14 = math.rsqrt %13 : vector<1x1x256xf32>
    %c0_6 = arith.constant 0 : index
    %c0_7 = arith.constant 0 : index
    %15 = vector.load %arg3[%c0_6, %c0_7] : memref<48x1xf32, #tpu.memory_space<vmem>>, vector<48x1xf32>
    %16 = vector.shape_cast %15 : vector<48x1xf32> to vector<1x48x1xf32>
    %17 = vector.broadcast %14 : vector<1x1x256xf32> to vector<1x48x256xf32>
    %18 = arith.mulf %0, %17 : vector<1x48x256xf32>
    %19 = vector.broadcast %16 : vector<1x48x1xf32> to vector<1x48x256xf32>
    %20 = arith.mulf %18, %19 : vector<1x48x256xf32>
    %c0_8 = arith.constant 0 : index
    %c0_9 = arith.constant 0 : index
    %c0_10 = arith.constant 0 : index
    %21 = vector.load %arg4[%c0_8, %c0_9, %c0_10] : memref<1x48x256xf32, #tpu.memory_space<vmem>>, vector<1x48x256xf32>
    tpu.vector_store %arg4[%c0_8, %c0_9, %c0_10], %20 {strides = array<i32>} : memref<1x48x256xf32, #tpu.memory_space<vmem>>, vector<1x48x256xf32>,
    return
  }
  func.func @transform_0(%arg0: i32, %arg1: i32) -> (i32, i32, i32) {
    %c0_i32 = arith.constant 0 : i32
    %c0_i32_0 = arith.constant 0 : i32
    return %arg0, %c0_i32, %arg1 : i32, i32, i32
  }
  func.func @transform_1(%arg0: i32, %arg1: i32) -> (i32, i32) {
    %c0_i32 = arith.constant 0 : i32
    %c0_i32_0 = arith.constant 0 : i32
    %c0_i32_1 = arith.constant 0 : i32
    return %c0_i32, %c0_i32_0 : i32, i32
  }
  func.func @transform_2(%arg0: i32, %arg1: i32) -> (i32, i32, i32) {
    %c0_i32 = arith.constant 0 : i32
    %c0_i32_0 = arith.constant 0 : i32
    return %arg0, %c0_i32, %arg1 : i32, i32, i32
  }
}

</mosaic_0001>

<llo_original>
// kernel: tpu_custom_call.1
$region0: #{tpu_custom_call.1}
  #allocation0 [shape = 'u32[]', space=smem, size = 0x4, offset = 0x4, fixed_abs, tag = 'smem constant byte address 0x4 - core index']
  #allocation1 [shape = 'u32[144,128]{1,0:T(1,128)}', space=vmem, size = 0x12000, scoped, tag = 'internal scratch']
  %s0 = inlined_call_operand.hbm [shape: f32[2,48,256], index: 0, kind: input, shape index: {}]
  %s1 = inlined_call_operand.vmem [shape: f32[48,1], index: 1, kind: input, shape index: {}]
  %s2 = inlined_call_operand.hbm [shape: f32[2,48,256], index: 2, kind: output, shape index: {}]
  %s3 = sld [smem:[#allocation0]]
  $region45: #{tpu_custom_call.1} parent=0
    _
  %s5 = ssub.s32 1, %s3
  %s6 = scalar_select 0, %s5, %s3
  $region1: #{tpu_custom_call.1} parent=0
    #allocation2 [shape = 'u8[98304]{0}', space=vmem, size = 0x18000, scoped, tag = 'input window, operand 0']
    #allocation3 [shape = 's32[2]{0}', space=sflag, size = 0x8, scoped, tag = 'scoped memory for tpu_custom_call.1']
    #allocation4 [shape = 's32[2]{0}', space=sflag, size = 0x8, scoped, tag = 'scoped memory for tpu_custom_call.1']
    #allocation5 [shape = 'u8[98304]{0}', space=vmem, size = 0x18000, scoped, tag = 'output window, operand 0']
    %7 = vsyncpa [#allocation3], 0
    %s8 = scalar_lea.sflag [#allocation3], 1
    %9 = vsyncpa %s8, 0
    %10 = vsyncpa [#allocation4], 0
    %s11 = scalar_lea.sflag [#allocation4], 1
    %12 = vsyncpa %s11, 0
    loop: start=0, step=1, limit=4
    $region2: #{tpu_custom_call.1} parent=1 // loop_pre_header
      _
    $region3: #{tpu_custom_call.1} parent=1 // loop_header
      %s14 = sphi 0, %s18
      %p15 = scmp.ge.s32.totalorder %s14, 4
      %s21 = sphi 0, %s33
      %s22 = sphi 0, %s29
      %s23 = sphi 0, %s21
      %s24 = sphi 0, %s22
      %s25 = sphi 0, %s23
      %s26 = sphi 0, %s24
      %s38 = sphi 0, %s40
      %s41 = sphi 0, %s38
      %s42 = sphi 0, %s41
      %s58 = sphi 0, %s42
      %s62 = sphi 0, %s62
      %s64 = sphi 0, %s62
      %s65 = sphi 0, %s64
      %s79 = sphi 0, %s65
      %s87 = sphi 0, %s89
      %s90 = sphi 0, %s87
      %s91 = sphi 0, %s90
      %s107 = sphi 0, %s91
    $region4: #{tpu_custom_call.1} parent=1 // loop_header_branch
      %17 = sbr.rel (%p15) target = $region8
    $region5: #{tpu_custom_call.1} parent=1 // loop_body
      %s19 = ssub.s32 %s14, 1
      %s20 = ssub.s32 %s14, 2
      %s27 = sadd.s32 1, %s22
      %p28 = scmp.ge.s32.totalorder %s27, 1
      %s29 = scalar_select %p28, 0, %s27
      %s30 = sadd.s32 1, %s21
      %s31 = scalar_select %p28, %s30, %s21
      %p32 = scmp.ge.s32.totalorder %s31, 2
      %s33 = scalar_select %p32, 0, %s31
      %s34 = ssub.s32 %s21, %s33
      %s35 = ssub.s32 %s22, %s29
      %s36 = sor.u32 %s34, %s35
      %p37 = scmp.eq.s32.totalorder %s36, 0
      %s39 = sadd.s32 %s38, 1
      %s40 = scalar_select %p37, %s38, %s39
      %p43 = pneg %p37
      %p44 = scmp.eq.s32.totalorder %s14, 1
      %p45 = por %p43, %p44
      %p46 = scmp.ne.s32.totalorder %s38, %s41
      %p47 = scmp.eq.s32.totalorder %s14, 0
      %p48 = por %p46, %p47
      %p49 = scmp.ne.s32.totalorder %s38, %s41
      %p50 = scmp.eq.s32.totalorder %s19, 1
      %p51 = por %p49, %p50
      %p52 = scmp.ne.s32.totalorder %s41, %s42
      %p53 = scmp.eq.s32.totalorder %s19, 0
      %p54 = por %p52, %p53
      %p55 = scmp.ne.s32.totalorder %s41, %s42
      %p56 = scmp.eq.s32.totalorder %s20, 1
      %p57 = por %p55, %p56
      %p59 = scmp.ne.s32.totalorder %s42, %s58
      %p60 = scmp.eq.s32.totalorder %s20, 0
      %p61 = por %p59, %p60
      %s63 = sadd.s32 %s62, 1
      %p66 = scmp.eq.s32.totalorder %s14, 1
      %p67 = scmp.ne.s32.totalorder %s62, %s64
      %p68 = scmp.eq.s32.totalorder %s14, 0
      %p69 = por %p67, %p68
      %p70 = scmp.ne.s32.totalorder %s62, %s64
      %p71 = scmp.eq.s32.totalorder %s19, 1
      %p72 = por %p70, %p71
      %p73 = scmp.ne.s32.totalorder %s64, %s65
      %p74 = scmp.eq.s32.totalorder %s19, 0
      %p75 = por %p73, %p74
      %p76 = scmp.ne.s32.totalorder %s64, %s65
      %p77 = scmp.eq.s32.totalorder %s20, 1
      %p78 = por %p76, %p77
      %p80 = scmp.ne.s32.totalorder %s65, %s79
      %p81 = scmp.eq.s32.totalorder %s20, 0
      %p82 = por %p80, %p81
      %s83 = ssub.s32 %s21, %s33
      %s84 = ssub.s32 %s22, %s29
      %s85 = sor.u32 %s83, %s84
      %p86 = scmp.eq.s32.totalorder %s85, 0
      %s88 = sadd.s32 %s87, 1
      %s89 = scalar_select %p86, %s87, %s88
      %p92 = pneg %p86
      %p93 = scmp.eq.s32.totalorder %s14, 1
      %p94 = por %p92, %p93
      %p95 = scmp.ne.s32.totalorder %s87, %s90
      %p96 = scmp.eq.s32.totalorder %s14, 0
      %p97 = por %p95, %p96
      %p98 = scmp.ne.s32.totalorder %s87, %s90
      %p99 = scmp.eq.s32.totalorder %s19, 1
      %p100 = por %p98, %p99
      %p101 = scmp.ne.s32.totalorder %s90, %s91
      %p102 = scmp.eq.s32.totalorder %s19, 0
      %p103 = por %p101, %p102
      %p104 = scmp.ne.s32.totalorder %s90, %s91
      %p105 = scmp.eq.s32.totalorder %s20, 1
      %p106 = por %p104, %p105
      %p108 = scmp.ne.s32.totalorder %s91, %s107
      %p109 = scmp.eq.s32.totalorder %s20, 0
      %p110 = por %p108, %p109
      %p111 = scmp.le.s32.totalorder 1, %s14
      %p112 = scmp.lt.s32.totalorder %s14, 3
      %p113 = pnand %p111, %p112
      %p114 = pneg %p113
      // Predicated region
      $region9: #{tpu_custom_call.1} parent=5 // pred_check
        _
      $region10: #{tpu_custom_call.1} parent=5 // pred_check_branch
        %116 = sbr.rel (%p113) target = $region12
      $region11: #{tpu_custom_call.1} parent=5 // pred_region
        %s117 = ssub.s32 %s14, 1
        // Predicated region
        $region13: #{tpu_custom_call.1} parent=11 // pred_check
          %p118 = pneg %p75
        $region14: #{tpu_custom_call.1} parent=11 // pred_check_branch
          %120 = sbr.rel (%p118) target = $region16
        $region15: #{tpu_custom_call.1} parent=11 // pred_region
          _
        $region16: #{tpu_custom_call.1} parent=11 // pred_fallthru
          _
      $region12: #{tpu_custom_call.1} parent=5 // pred_fallthru
        _
      %p121 = scmp.lt.s32.totalorder %s14, 2
      // Predicated region
      $region17: #{tpu_custom_call.1} parent=5 // pred_check
        %p122 = pneg %p121
      $region18: #{tpu_custom_call.1} parent=5 // pred_check_branch
        %124 = sbr.rel (%p122) target = $region20
      $region19: #{tpu_custom_call.1} parent=5 // pred_region
        // Predicated region
        $region21: #{tpu_custom_call.1} parent=19 // pred_check
          %p125 = pneg %p48
        $region22: #{tpu_custom_call.1} parent=19 // pred_check_branch
          %127 = sbr.rel (%p125) target = $region24
        $region23: #{tpu_custom_call.1} parent=19 // pred_region
          %s128 = sand.u32 %s38, 1
          %s129 = scalar_lea.sflag [#allocation3], %s128
          %s130 = sand.u32 %s38, 1
          %s131 = smul.addr %s130, 96
          %s132 = scalar_lea.vmem [#allocation2], %s131
          %s133 = smul.u32 2, %s22
          %s135 = ssub.s32 1536, 1536
          %136 = vsyncadd %s129, %s135
          %s137 = smul.addr %s21, 12
          %s138 = sadd.s32 %s133, %s137
          %s139 = smul.addr %s138, 128
          %s140 = scalar_lea.hbm %s0, %s139
          %s141 = sshll.u32 %s132, 4
          %s142 = int_to_ptr.vmem [resolvable:$true] %s141
          %147 = dma.hbm_to_vmem [thread:$0]  %s140, 1536, %s142, %s129, 256, 256, 16
        $region24: #{tpu_custom_call.1} parent=19 // pred_fallthru
          _
      $region20: #{tpu_custom_call.1} parent=5 // pred_fallthru
        _
      %p148 = scmp.le.s32.totalorder 1, %s14
      %p149 = scmp.lt.s32.totalorder %s14, 3
      %p150 = pnand %p148, %p149
      %p151 = pneg %p150
      // Predicated region
      $region25: #{tpu_custom_call.1} parent=5 // pred_check
        _
      $region26: #{tpu_custom_call.1} parent=5 // pred_check_branch
        %153 = sbr.rel (%p150) target = $region28
      $region27: #{tpu_custom_call.1} parent=5 // pred_region
        %s154 = ssub.s32 %s14, 1
        %s155 = sand.u32 %s41, 1
        %s156 = scalar_lea.sflag [#allocation3], %s155
        %s157 = sand.u32 %s41, 1
        %s158 = smul.addr %s157, 96
        %s159 = scalar_lea.vmem [#allocation2], %s158
        // Predicated region
        $region29: #{tpu_custom_call.1} parent=27 // pred_check
          %p160 = pneg %p54
        $region30: #{tpu_custom_call.1} parent=27 // pred_check_branch
          %162 = sbr.rel (%p160) target = $region32
        $region31: #{tpu_custom_call.1} parent=27 // pred_region
          %163 = dma.done %s156, 1536
        $region32: #{tpu_custom_call.1} parent=27 // pred_fallthru
          _
        %s164 = sand.u32 %s41, 1
        %s165 = scalar_lea.sflag [#allocation3], %s164
        %s166 = sand.u32 %s41, 1
        %s167 = smul.addr %s166, 96
        %s168 = scalar_lea.vmem [#allocation2], %s167
        %p169 = pneg %p54
        %p170 = pneg %p51
        %p171 = pneg %p75
        %p172 = pneg %p72
        %p173 = pneg %p103
        %p174 = pneg %p100
        %s175 = sand.u32 %s90, 1
        %s176 = scalar_lea.sflag [#allocation4], %s175
        %s177 = sand.u32 %s90, 1
        %s178 = smul.addr %s177, 96
        %s179 = scalar_lea.vmem [#allocation5], %s178
        %s180 = smul.u32 2, %s24
        %s181 = smul.u32 2, %s24
        %v182 = vld [vmem:[%s159] sm:$0xff]
        %v183 = vld [vmem:[%s159 + $0x8] sm:$0xff]
        %v184 = vld [vmem:[%s159 + $0x10] sm:$0xff]
        %v185 = vld [vmem:[%s159 + $0x18] sm:$0xff]
        %v186 = vld [vmem:[%s159 + $0x20] sm:$0xff]
        %v187 = vld [vmem:[%s159 + $0x28] sm:$0xff]
        %v188 = vld [vmem:[%s159 + $0x30] sm:$0xff]
        %v189 = vld [vmem:[%s159 + $0x38] sm:$0xff]
        %v190 = vld [vmem:[%s159 + $0x40] sm:$0xff]
        %v191 = vld [vmem:[%s159 + $0x48] sm:$0xff]
        %v192 = vld [vmem:[%s159 + $0x50] sm:$0xff]
        %v193 = vld [vmem:[%s159 + $0x58] sm:$0xff]
        %v194 = vadd.f32 %v182, %v184
        %v195 = vadd.f32 %v194, %v186
        %v196 = vadd.f32 %v195, %v188
        %v197 = vadd.f32 %v196, %v190
        %v198 = vadd.f32 %v197, %v192
        %v199 = vrot.slane %v198, 4
        %v200 = vadd.f32 %v198, %v199
        %v201 = vrot.slane %v200, 2
        %v202 = vadd.f32 %v200, %v201
        %v203 = vrot.slane %v202, 1
        %v204 = vadd.f32 %v202, %v203
        %v205 = vadd.f32 %v183, %v185
        %v206 = vadd.f32 %v205, %v187
        %v207 = vadd.f32 %v206, %v189
        %v208 = vadd.f32 %v207, %v191
        %v209 = vadd.f32 %v208, %v193
        %v210 = vrot.slane %v209, 4
        %v211 = vadd.f32 %v209, %v210
        %v212 = vrot.slane %v211, 2
        %v213 = vadd.f32 %v211, %v212
        %v214 = vrot.slane %v213, 1
        %v215 = vadd.f32 %v213, %v214
        %v216 = vmul.f32 %v204, 0.020833334
        %v217 = vmul.f32 %v215, 0.020833334
        %v218 = vsub.f32 %v182, %v216
        %v219 = vsub.f32 %v183, %v217
        %v220 = vsub.f32 %v184, %v216
        %v221 = vsub.f32 %v185, %v217
        %v222 = vsub.f32 %v186, %v216
        %v223 = vsub.f32 %v187, %v217
        %v224 = vsub.f32 %v188, %v216
        %v225 = vsub.f32 %v189, %v217
        %v226 = vsub.f32 %v190, %v216
        %v227 = vsub.f32 %v191, %v217
        %v228 = vsub.f32 %v192, %v216
        %v229 = vsub.f32 %v193, %v217
        %v230 = vmul.f32 %v218, %v218
        %v231 = vmul.f32 %v219, %v219
        %v232 = vmul.f32 %v220, %v220
        %v233 = vmul.f32 %v221, %v221
        %v234 = vmul.f32 %v222, %v222
        %v235 = vmul.f32 %v223, %v223
        %v236 = vmul.f32 %v224, %v224
        %v237 = vmul.f32 %v225, %v225
        %v238 = vmul.f32 %v226, %v226
        %v239 = vmul.f32 %v227, %v227
        %v240 = vmul.f32 %v228, %v228
        %v241 = vmul.f32 %v229, %v229
        %v242 = vadd.f32 %v230, %v232
        %v243 = vadd.f32 %v242, %v234
        %v244 = vadd.f32 %v243, %v236
        %v245 = vadd.f32 %v244, %v238
        %v246 = vadd.f32 %v245, %v240
        %v247 = vrot.slane %v246, 4
        %v248 = vadd.f32 %v246, %v247
        %v249 = vrot.slane %v248, 2
        %v250 = vadd.f32 %v248, %v249
        %v251 = vrot.slane %v250, 1
        %v252 = vadd.f32 %v250, %v251
        %v253 = vadd.f32 %v231, %v233
        %v254 = vadd.f32 %v253, %v235
        %v255 = vadd.f32 %v254, %v237
        %v256 = vadd.f32 %v255, %v239
        %v257 = vadd.f32 %v256, %v241
        %v258 = vrot.slane %v257, 4
        %v259 = vadd.f32 %v257, %v258
        %v260 = vrot.slane %v259, 2
        %v261 = vadd.f32 %v259, %v260
        %v262 = vrot.slane %v261, 1
        %v263 = vadd.f32 %v261, %v262
        %v264 = vmul.f32 %v252, 0.020833334
        %v265 = vmul.f32 %v263, 0.020833334
        %v266 = vadd.f32 %v264, 1e-05
        %v267 = vadd.f32 %v265, 1e-05
        %v268 = vrsqrt.pop %v266
        %v269 = vrsqrt.pop %v267
        %v270 = vld [vmem:[%s1] sm:$0xff]
        %v271 = vld [vmem:[%s1 + $0x8] sm:$0xff]
        %v272 = vld [vmem:[%s1 + $0x10] sm:$0xff]
        %v273 = vld [vmem:[%s1 + $0x18] sm:$0xff]
        %v274 = vld [vmem:[%s1 + $0x20] sm:$0xff]
        %v275 = vld [vmem:[%s1 + $0x28] sm:$0xff]
        %v276 = vmul.f32 %v182, %v268
        %v277 = vmul.f32 %v183, %v269
        %v278 = vmul.f32 %v184, %v268
        %v279 = vmul.f32 %v185, %v269
        %v280 = vmul.f32 %v186, %v268
        %v281 = vmul.f32 %v187, %v269
        %v282 = vmul.f32 %v188, %v268
        %v283 = vmul.f32 %v189, %v269
        %v284 = vmul.f32 %v190, %v268
        %v285 = vmul.f32 %v191, %v269
        %v286 = vmul.f32 %v192, %v268
        %v287 = vmul.f32 %v193, %v269
        %289 = vset.pattern.permute.xlu0 0
        %290 = vperm.xlu0 %289, %v270
        %v291 = vpop.permute.xlu0 %290
        %294 = vset.pattern.permute.xlu0 0
        %295 = vperm.xlu0 %294, %v271
        %v296 = vpop.permute.xlu0 %295
        %299 = vset.pattern.permute.xlu0 0
        %300 = vperm.xlu0 %299, %v272
        %v301 = vpop.permute.xlu0 %300
        %304 = vset.pattern.permute.xlu0 0
        %305 = vperm.xlu0 %304, %v273
        %v306 = vpop.permute.xlu0 %305
        %309 = vset.pattern.permute.xlu0 0
        %310 = vperm.xlu0 %309, %v274
        %v311 = vpop.permute.xlu0 %310
        %314 = vset.pattern.permute.xlu0 0
        %315 = vperm.xlu0 %314, %v275
        %v316 = vpop.permute.xlu0 %315
        %v318 = vmul.f32 %v276, %v291
        %v319 = vmul.f32 %v277, %v291
        %v320 = vmul.f32 %v278, %v296
        %v321 = vmul.f32 %v279, %v296
        %v322 = vmul.f32 %v280, %v301
        %v323 = vmul.f32 %v281, %v301
        %v324 = vmul.f32 %v282, %v306
        %v325 = vmul.f32 %v283, %v306
        %v326 = vmul.f32 %v284, %v311
        %v327 = vmul.f32 %v285, %v311
        %v328 = vmul.f32 %v286, %v316
        %v329 = vmul.f32 %v287, %v316
        %330 = vst [vmem:[%s179] sm:$0xff] %v318
        %331 = vst [vmem:[%s179 + $0x8] sm:$0xff] %v319
        %332 = vst [vmem:[%s179 + $0x10] sm:$0xff] %v320
        %333 = vst [vmem:[%s179 + $0x18] sm:$0xff] %v321
        %334 = vst [vmem:[%s179 + $0x20] sm:$0xff] %v322
        %335 = vst [vmem:[%s179 + $0x28] sm:$0xff] %v323
        %336 = vst [vmem:[%s179 + $0x30] sm:$0xff] %v324
        %337 = vst [vmem:[%s179 + $0x38] sm:$0xff] %v325
        %338 = vst [vmem:[%s179 + $0x40] sm:$0xff] %v326
        %339 = vst [vmem:[%s179 + $0x48] sm:$0xff] %v327
        %340 = vst [vmem:[%s179 + $0x50] sm:$0xff] %v328
        %341 = vst [vmem:[%s179 + $0x58] sm:$0xff] %v329
        %s342 = sand.u32 %s90, 1
        %s343 = scalar_lea.sflag [#allocation4], %s342
        %s344 = sand.u32 %s90, 1
        %s345 = smul.addr %s344, 96
        %s346 = scalar_lea.vmem [#allocation5], %s345
        // Predicated region
        $region33: #{tpu_custom_call.1} parent=27 // pred_check
          %p347 = pneg %p100
        $region34: #{tpu_custom_call.1} parent=27 // pred_check_branch
          %349 = sbr.rel (%p347) target = $region36
        $region35: #{tpu_custom_call.1} parent=27 // pred_region
          %s350 = smul.u32 2, %s24
          %s352 = ssub.s32 1536, 1536
          %353 = vsyncadd %s343, %s352
          %s354 = smul.addr %s23, 12
          %s355 = sadd.s32 %s350, %s354
          %s356 = smul.addr %s355, 128
          %s357 = scalar_lea.hbm %s2, %s356
          %s358 = sshll.u32 %s346, 4
          %s359 = int_to_ptr.vmem [resolvable:$true] %s358
          %364 = dma.vmem_to_hbm [thread:$0]  %s359, 1536, %s357, %s343, 256, 256, 16
        $region36: #{tpu_custom_call.1} parent=27 // pred_fallthru
          _
      $region28: #{tpu_custom_call.1} parent=5 // pred_fallthru
        _
      %p365 = scmp.le.s32.totalorder 2, %s14
      // Predicated region
      $region37: #{tpu_custom_call.1} parent=5 // pred_check
        %p366 = pneg %p365
      $region38: #{tpu_custom_call.1} parent=5 // pred_check_branch
        %368 = sbr.rel (%p366) target = $region40
      $region39: #{tpu_custom_call.1} parent=5 // pred_region
        %s369 = ssub.s32 %s14, 2
        // Predicated region
        $region41: #{tpu_custom_call.1} parent=39 // pred_check
          %p370 = pneg %p106
        $region42: #{tpu_custom_call.1} parent=39 // pred_check_branch
          %372 = sbr.rel (%p370) target = $region44
        $region43: #{tpu_custom_call.1} parent=39 // pred_region
          %s373 = sand.u32 %s91, 1
          %s374 = scalar_lea.sflag [#allocation4], %s373
          %s375 = sand.u32 %s91, 1
          %s376 = smul.addr %s375, 96
          %s377 = scalar_lea.vmem [#allocation5], %s376
          %378 = dma.done %s374, 1536
        $region44: #{tpu_custom_call.1} parent=39 // pred_fallthru
          _
      $region40: #{tpu_custom_call.1} parent=5 // pred_fallthru
        _
    $region6: #{tpu_custom_call.1} parent=1 // loop_footer
      %s18 = sadd.s32 1, %s14
    $region7: #{tpu_custom_call.1} parent=1 // loop_footer_branch
      %13 = sbr.rel target = $region3
    $region8: #{tpu_custom_call.1} parent=1 // loop_exit
      _
    %379 = vsyncpa [#allocation3], 1
    %s380 = scalar_lea.sflag [#allocation3], 1
    %381 = vsyncpa %s380, 1
    %382 = vsyncpa [#allocation4], 1
    %s383 = scalar_lea.sflag [#allocation4], 1
    %384 = vsyncpa %s383, 1

</llo_original>
